<compile_context>
chip_gen: v5e
topology: v5e:2x2
jax: 0.10.0
libtpu: 0.0.40
codegen_flags: <defaults>
</compile_context>

<pallas_src>
import jax
import jax.numpy as jnp
from jax.experimental import pallas as pl
from jax.experimental.pallas import tpu as pltpu


def _identity_kernel(x_ref, o_ref):
    # Hot path: copy the current VMEM tile to the (aliased) output tile.
    o_ref[...] = x_ref[...]


def _sublane_multiple(dtype) -> int:
    """Minimum dtype-aware sublane packing (8 for 4B, 16 for 2B, 32 for 1B)."""
    itemsize = jnp.dtype(dtype).itemsize
    return max(8, 32 // max(1, itemsize))


def dummy_encoder_forward(x, *, tile_bytes: int = 4 * 1024 * 1024):
    """Identity forward pass of DummyEncoder implemented via pallas_call.

    x: arbitrary-rank array (typically (batch, seq, hidden)).  Returns x.
    """
    if x.ndim == 0:
        # Degenerate scalar: nothing to tile.
        return x

    orig_shape = x.shape
    dtype = x.dtype
    itemsize = jnp.dtype(dtype).itemsize

    # Flatten everything but the last (lane) dim into one row axis.
    H = orig_shape[-1]
    rows = 1
    for d in orig_shape[:-1]:
        rows *= d
    if x.ndim == 1:
        rows, H = 1, orig_shape[0]
    x2 = x.reshape(rows, H)

    # Pick a row-block so a tile is ~tile_bytes, rounded to the dtype-aware
    # sublane multiple; fall back to the full row extent for small inputs.
    sub = _sublane_multiple(dtype)
    row_block = (tile_bytes // max(1, H * itemsize)) // sub * sub
    row_block = max(sub, row_block)
    if row_block >= rows:
        row_block = rows  # single block == full array dims (always legal)

    grid = (pl.cdiv(rows, row_block),)
    spec = pl.BlockSpec((row_block, H), lambda i: (i, 0))

    # Double-buffered input + output tiles, plus headroom.  Stays well under
    # the 64 MiB physical VMEM of v7x (and the 128 MiB of v5e/v6e).
    block_bytes = row_block * H * itemsize
    vmem_limit = min(48 * 1024 * 1024, 4 * block_bytes + 4 * 1024 * 1024)

    y2 = pl.pallas_call(
        _identity_kernel,
        out_shape=jax.ShapeDtypeStruct((rows, H), dtype),
        grid=grid,
        in_specs=[spec],
        out_specs=spec,
        input_output_aliases={0: 0},
        compiler_params=pltpu.CompilerParams(
            dimension_semantics=("parallel",),
            vmem_limit_bytes=vmem_limit,
        ),
    )(x2)

    return y2.reshape(orig_shape)


class DummyEncoderPallas:
    """Mirror of the PyTorch DummyEncoder, with the forward on TPU Pallas."""

    def __init__(self, config=None):
        # Deterministic init of the unused nn.Linear(1, 1) parameters.
        # TODO(synk): these params are never used in forward (matches reference).
        key_w, key_b = jax.random.split(jax.random.PRNGKey(42))
        self.dummy_weight = jax.random.uniform(
            key_w, (1, 1), jnp.float32, minval=-1.0, maxval=1.0)
        self.dummy_bias = jax.random.uniform(
            key_b, (1,), jnp.float32, minval=-1.0, maxval=1.0)
        self.cat_names = []
        self.num_values = []
        self.cat_max_size = {}
        self.embed_size = {}

    def __call__(self, x):
        return dummy_encoder_forward(x)

    @property
    def category_names(self):
        return set(self.cat_names + self.num_values)

    @property
    def category_max_size(self):
        return self.cat_max_size


if __name__ == "__main__":
    key = jax.random.PRNGKey(0)
    enc = DummyEncoderPallas(config=None)

    # Small shapes: batch=2, seq=8, hidden=128 (lane-aligned last dim), f32.
    x = jax.random.normal(key, (2, 8, 128), dtype=jnp.float32)
    y = jax.block_until_ready(enc(x))
    assert y.shape == x.shape and y.dtype == x.dtype
    assert bool(jnp.array_equal(y, x))

    # Secondary check: non-128 lane width + packed dtype (bf16) still works.
    x2 = jax.random.normal(jax.random.PRNGKey(0), (2, 8, 32)).astype(jnp.bfloat16)
    y2 = jax.block_until_ready(enc(x2))
    assert y2.shape == x2.shape and y2.dtype == x2.dtype
    assert bool(jnp.array_equal(y2, x2))

    print("KERNEL_OK")
</pallas_src>

<mosaic_0001>
module attributes {stable_mosaic.version = 11 : i64} {
  func.func @_identity_kernel(%arg0: i32, %arg1: memref<16x128xf32, #tpu.memory_space<vmem>>, %arg2: memref<16x128xf32, #tpu.memory_space<vmem>>) attributes {dimension_semantics = [#tpu.dimension_semantics<parallel>], iteration_bounds = array<i64: 1>, scalar_prefetch = 0 : i64, scratch_operands = 0 : i64, tpu.core_type = #tpu.core_type<tc>, window_params = [{transform_indices = @transform_0, window_bounds = array<i64: 16, 128>}, {transform_indices = @transform_1, window_bounds = array<i64: 16, 128>}]} {
    %c0 = arith.constant 0 : index
    %c0_0 = arith.constant 0 : index
    %0 = vector.load %arg1[%c0, %c0_0] : memref<16x128xf32, #tpu.memory_space<vmem>>, vector<16x128xf32>
    %c0_1 = arith.constant 0 : index
    %c0_2 = arith.constant 0 : index
    %1 = vector.load %arg2[%c0_1, %c0_2] : memref<16x128xf32, #tpu.memory_space<vmem>>, vector<16x128xf32>
    tpu.vector_store %arg2[%c0_1, %c0_2], %0 {strides = array<i32>} : memref<16x128xf32, #tpu.memory_space<vmem>>, vector<16x128xf32>,
    return
  }
  func.func @transform_0(%arg0: i32) -> (i32, i32) {
    %c0_i32 = arith.constant 0 : i32
    %c0_i32_0 = arith.constant 0 : i32
    return %arg0, %c0_i32 : i32, i32
  }
  func.func @transform_1(%arg0: i32) -> (i32, i32) {
    %c0_i32 = arith.constant 0 : i32
    %c0_i32_0 = arith.constant 0 : i32
    return %arg0, %c0_i32 : i32, i32
  }
}

</mosaic_0001>

<llo_original>
// kernel: tpu_custom_call.1
$region0: #{tpu_custom_call.1}
  #allocation0 [shape = 'u32[]', space=smem, size = 0x4, offset = 0x4, fixed_abs, tag = 'smem constant byte address 0x4 - core index']
  #allocation1 [shape = 'u32[72,128]{1,0:T(1,128)}', space=vmem, size = 0x9000, scoped, tag = 'internal scratch']
  %s0 = inlined_call_operand.hbm [shape: f32[16,128], index: 0, kind: input, shape index: {}, may-alias: {0,1}]
  %s1 = inlined_call_operand.hbm [shape: f32[16,128], index: 1, kind: output, shape index: {}, may-alias: {0,1}]
  %s2 = sld [smem:[#allocation0]]
  $region18: #{tpu_custom_call.1} parent=0
    _
  %s4 = ssub.s32 1, %s2
  %s5 = scalar_select 0, %s4, %s2
  $region1: #{tpu_custom_call.1} parent=0
    #allocation2 [shape = 'u8[8192]{0}', space=vmem, size = 0x2000, scoped, tag = 'input window, operand 0, single buffered']
    #allocation3 [shape = 's32[1]{0}', space=sflag, size = 0x4, scoped, tag = 'scoped memory for tpu_custom_call.1']
    #allocation4 [shape = 's32[1]{0}', space=sflag, size = 0x4, scoped, tag = 'scoped memory for tpu_custom_call.1']
    #allocation5 [shape = 'u8[8192]{0}', space=vmem, size = 0x2000, scoped, tag = 'output window, operand 0, single buffered']
    %6 = vsyncpa [#allocation3], 0
    %7 = vsyncpa [#allocation4], 0
    // Predicated region
    $region2: #{tpu_custom_call.1} parent=1 // pred_check
      _
    $region3: #{tpu_custom_call.1} parent=1 // pred_check_branch
      %9 = sbr.rel (0) target = $region5
    $region4: #{tpu_custom_call.1} parent=1 // pred_region
      %11 = vsyncadd [#allocation3], 0
      %s12 = sshll.u32 %s0, 4
      %s13 = int_to_ptr.hbm [resolvable:$true] %s12
      %s14 = sshll.u32 [#allocation2], 4
      %s15 = int_to_ptr.vmem [resolvable:$true] %s14
      %20 = dma.hbm_to_vmem [thread:$0]  %s13, 256, %s15, [#allocation3], 128, 128, 8
    $region5: #{tpu_custom_call.1} parent=1 // pred_fallthru
      _
    // Predicated region
    $region6: #{tpu_custom_call.1} parent=1 // pred_check
      _
    $region7: #{tpu_custom_call.1} parent=1 // pred_check_branch
      %22 = sbr.rel (0) target = $region9
    $region8: #{tpu_custom_call.1} parent=1 // pred_region
      %24 = dma.done [#allocation3], 256
    $region9: #{tpu_custom_call.1} parent=1 // pred_fallthru
      _
    %v25 = vld [vmem:[#allocation2] sm:$0xff]
    %v26 = vld [vmem:[#allocation2 + $0x8] sm:$0xff]
    %27 = vst [vmem:[#allocation5] sm:$0xff] %v25
    %28 = vst [vmem:[#allocation5 + $0x8] sm:$0xff] %v26
    // Predicated region
    $region10: #{tpu_custom_call.1} parent=1 // pred_check
      _
    $region11: #{tpu_custom_call.1} parent=1 // pred_check_branch
      %30 = sbr.rel (0) target = $region13
    $region12: #{tpu_custom_call.1} parent=1 // pred_region
      %32 = vsyncadd [#allocation4], 0
      %s33 = sshll.u32 [#allocation5], 4
      %s34 = int_to_ptr.vmem [resolvable:$true] %s33
      %s35 = sshll.u32 %s1, 4
      %s36 = int_to_ptr.hbm [resolvable:$true] %s35
      %41 = dma.vmem_to_hbm [thread:$0]  %s34, 256, %s36, [#allocation4], 128, 128, 8
    $region13: #{tpu_custom_call.1} parent=1 // pred_fallthru
      _
    // Predicated region
    $region14: #{tpu_custom_call.1} parent=1 // pred_check
      _
    $region15: #{tpu_custom_call.1} parent=1 // pred_check_branch
      %43 = sbr.rel (0) target = $region17
    $region16: #{tpu_custom_call.1} parent=1 // pred_region
      %45 = dma.done [#allocation4], 256
    $region17: #{tpu_custom_call.1} parent=1 // pred_fallthru
      _
    %46 = vsyncpa [#allocation3], 1
    %47 = vsyncpa [#allocation4], 1

</llo_original>
